<compile_context>
chip_gen: v7x
topology: tpu7x:2x2x1
jax: 0.10.0
libtpu: 0.0.40
codegen_flags: <defaults>
</compile_context>

<pallas_src>
import jax
import jax.numpy as jnp
from jax.experimental import pallas as pl
from jax.experimental.pallas import tpu as pltpu


def _round_up(x, m):
    return ((x + m - 1) // m) * m


def _wide_kernel(idx_ref, out_ref):
    # idx_ref: (K, TB) int32 in VMEM   (batch on lanes, K on sublanes)
    # out_ref: (D, TB) float in VMEM   (batch on lanes, nb_digits on sublanes)
    K, TB = idx_ref.shape
    D = out_ref.shape[0]

    idx = idx_ref[...]                                                   # (K, TB)
    d_iota = jax.lax.broadcasted_iota(jnp.int32, (D, TB), dimension=0)   # (D, TB)

    # Boolean OR accumulation over the (small, static) K scatter indices.
    acc = d_iota == idx[0:1, :]                                          # (D, TB) bool
    for j in range(1, K):
        acc = acc | (d_iota == idx[j:j + 1, :])

    out_ref[...] = acc.astype(out_ref.dtype)


def wide_forward(indices, nb_digits=10, *, tile_b=2048, out_dtype=jnp.float32):
    """JAX/Pallas equivalent of Wide(nb_digits).forward(indices).

    indices: (B, K) integer array of dim-1 scatter indices.
    Returns: (B, nb_digits) multi-hot matrix in `out_dtype` (float32 default,
    matching torch.FloatTensor).
    """
    indices = indices.astype(jnp.int32)
    B, K = indices.shape

    # Batch tile: multiple of 128 (lane width) so output stores are unmasked.
    # Blocks are tiny even double-buffered (<0.5 MiB at tile_b=2048), so this
    # fits comfortably inside every generation's scoped-VMEM default
    # (16 MiB v5e / 32 MiB v6e,v7x).
    TB = min(tile_b, _round_up(B, 128))
    B_pad = _round_up(B, TB)

    # Transposed, padded index block: (K, B_pad); pad with -1 (matches no lane
    # -> padded rows produce all-zero output rows, sliced off below).
    idx_t = jnp.full((K, B_pad), -1, dtype=jnp.int32).at[:, :B].set(indices.T)

    grid = (B_pad // TB,)
    out_t = pl.pallas_call(
        _wide_kernel,
        out_shape=jax.ShapeDtypeStruct((nb_digits, B_pad), out_dtype),
        grid=grid,
        in_specs=[pl.BlockSpec((K, TB), lambda i: (0, i))],
        out_specs=pl.BlockSpec((nb_digits, TB), lambda i: (0, i)),
        compiler_params=pltpu.CompilerParams(
            dimension_semantics=("parallel",)),  # shards across v7x's 2 TCs
    )(idx_t)

    # One wrapper-side transpose back to the PyTorch layout (B, nb_digits).
    return out_t[:, :B].T


def _reference(indices, nb_digits):
    B = indices.shape[0]
    ref = jnp.zeros((B, nb_digits), jnp.float32)
    return ref.at[jnp.arange(B)[:, None], indices].set(1.0)


if __name__ == "__main__":
    key = jax.random.PRNGKey(0)
    NB_DIGITS = 10

    # Small deterministic test (single grid step, padded batch).
    k1, k2 = jax.random.split(key)
    idx_small = jax.random.randint(k1, (8, 3), 0, NB_DIGITS, dtype=jnp.int32)
    out_small = jax.block_until_ready(wide_forward(idx_small, NB_DIGITS))
    assert out_small.shape == (8, NB_DIGITS)
    assert out_small.dtype == jnp.float32
    assert jnp.allclose(out_small, _reference(idx_small, NB_DIGITS))

    # Slightly larger, non-multiple-of-128 batch to exercise padding path.
    idx_big = jax.random.randint(k2, (300, 3), 0, NB_DIGITS, dtype=jnp.int32)
    out_big = jax.block_until_ready(wide_forward(idx_big, NB_DIGITS))
    assert out_big.shape == (300, NB_DIGITS)
    assert jnp.allclose(out_big, _reference(idx_big, NB_DIGITS))

    print("KERNEL_OK")
</pallas_src>

<mosaic_0001>
module attributes {stable_mosaic.version = 11 : i64} {
  func.func @_wide_kernel(%arg0: i32, %arg1: memref<3x128xi32, #tpu.memory_space<vmem>>, %arg2: memref<10x128xf32, #tpu.memory_space<vmem>>) attributes {dimension_semantics = [#tpu.dimension_semantics<parallel>], iteration_bounds = array<i64: 1>, scalar_prefetch = 0 : i64, scratch_operands = 0 : i64, tpu.core_type = #tpu.core_type<tc>, window_params = [{transform_indices = @transform_0, window_bounds = array<i64: 3, 128>}, {transform_indices = @transform_1, window_bounds = array<i64: 10, 128>}]} {
    %c0 = arith.constant 0 : index
    %c0_0 = arith.constant 0 : index
    %0 = vector.load %arg1[%c0, %c0_0] : memref<3x128xi32, #tpu.memory_space<vmem>>, vector<3x128xi32>
    %1 = tpu.iota {dimensions = array<i32: 0>} : vector<10x128xi32>
    %2 = vector.extract_strided_slice %0 {offsets = [0, 0], sizes = [1, 128], strides = [1, 1]} : vector<3x128xi32> to vector<1x128xi32>
    %3 = vector.broadcast %2 : vector<1x128xi32> to vector<10x128xi32>
    %4 = arith.cmpi eq, %1, %3 : vector<10x128xi32>
    %5 = vector.extract_strided_slice %0 {offsets = [1, 0], sizes = [1, 128], strides = [1, 1]} : vector<3x128xi32> to vector<1x128xi32>
    %6 = vector.broadcast %5 : vector<1x128xi32> to vector<10x128xi32>
    %7 = arith.cmpi eq, %1, %6 : vector<10x128xi32>
    %8 = arith.ori %4, %7 : vector<10x128xi1>
    %9 = vector.extract_strided_slice %0 {offsets = [2, 0], sizes = [1, 128], strides = [1, 1]} : vector<3x128xi32> to vector<1x128xi32>
    %10 = vector.broadcast %9 : vector<1x128xi32> to vector<10x128xi32>
    %11 = arith.cmpi eq, %1, %10 : vector<10x128xi32>
    %12 = arith.ori %8, %11 : vector<10x128xi1>
    %13 = arith.extui %12 : vector<10x128xi1> to vector<10x128xi32>
    %14 = arith.sitofp %13 : vector<10x128xi32> to vector<10x128xf32>
    %c0_1 = arith.constant 0 : index
    %c0_2 = arith.constant 0 : index
    %15 = vector.load %arg2[%c0_1, %c0_2] : memref<10x128xf32, #tpu.memory_space<vmem>>, vector<10x128xf32>
    tpu.vector_store %arg2[%c0_1, %c0_2], %14 {strides = array<i32>} : memref<10x128xf32, #tpu.memory_space<vmem>>, vector<10x128xf32>,
    return
  }
  func.func @transform_0(%arg0: i32) -> (i32, i32) {
    %c0_i32 = arith.constant 0 : i32
    %c0_i32_0 = arith.constant 0 : i32
    return %c0_i32, %arg0 : i32, i32
  }
  func.func @transform_1(%arg0: i32) -> (i32, i32) {
    %c0_i32 = arith.constant 0 : i32
    %c0_i32_0 = arith.constant 0 : i32
    return %c0_i32, %arg0 : i32, i32
  }
}

</mosaic_0001>

<llo_original>
// kernel: tpu_custom_call.1
$region0: #{tpu_custom_call.1}
  #allocation0 [shape = 'u32[]', space=smem, size = 0x4, offset = 0x4, fixed_abs, tag = 'smem constant byte address 0x4 - core index']
  #allocation1 [shape = 'u32[144,128]{1,0:T(1,128)}', space=vmem, size = 0x12000, scoped, tag = 'internal scratch']
  %s0 = inlined_call_operand.hbm [shape: s32[3,128], index: 0, kind: input, shape index: {}]
  %s1 = inlined_call_operand.hbm [shape: f32[10,128], index: 1, kind: output, shape index: {}]
  %s2 = sld [smem:[#allocation0]]
  $region18: #{tpu_custom_call.1} parent=0
    _
  %s4 = ssub.s32 1, %s2
  %s5 = scalar_select 0, %s4, %s2
  $region1: #{tpu_custom_call.1} parent=0
    #allocation2 [shape = 'u8[2048]{0}', space=vmem, size = 0x800, scoped, tag = 'input window, operand 0, single buffered']
    #allocation3 [shape = 's32[1]{0}', space=sflag, size = 0x4, scoped, tag = 'scoped memory for tpu_custom_call.1']
    #allocation4 [shape = 's32[1]{0}', space=sflag, size = 0x4, scoped, tag = 'scoped memory for tpu_custom_call.1']
    #allocation5 [shape = 'u8[8192]{0}', space=vmem, size = 0x2000, scoped, tag = 'output window, operand 0, single buffered']
    %6 = vsyncpa [#allocation3], 0
    %7 = vsyncpa [#allocation4], 0
    // Predicated region
    $region2: #{tpu_custom_call.1} parent=1 // pred_check
      _
    $region3: #{tpu_custom_call.1} parent=1 // pred_check_branch
      %9 = sbr.rel (0) target = $region5
    $region4: #{tpu_custom_call.1} parent=1 // pred_region
      %s11 = ssub.s32 64, 64
      %12 = vsyncadd [#allocation3], %s11
      %s14 = sshll.u32 [#allocation2], 4
      %s15 = int_to_ptr.vmem [resolvable:$true] %s14
      %17 = dma.hbm_to_vmem [thread:$0]  %s0, 64, %s15, [#allocation3]
    $region5: #{tpu_custom_call.1} parent=1 // pred_fallthru
      _
    // Predicated region
    $region6: #{tpu_custom_call.1} parent=1 // pred_check
      _
    $region7: #{tpu_custom_call.1} parent=1 // pred_check_branch
      %19 = sbr.rel (0) target = $region9
    $region8: #{tpu_custom_call.1} parent=1 // pred_region
      %20 = dma.done [#allocation3], 64
    $region9: #{tpu_custom_call.1} parent=1 // pred_fallthru
      _
    %v21 = vld [vmem:[#allocation2] sm:$0x7]
    %v22 = vlaneseq
    %v23 = vshrl.u32 %v22, 7
    %v24 = vadd.s32 %v23, 8
    %v25 = vlaneseq
    %v26 = vshrl.u32 %v25, 7
    %v27 = vsub.s32 0, %v26
    %v28 = vrot.slane %v21, %v27
    %vm29 = vcmp.eq.s32.totalorder %v23, %v28
    %vm30 = vcmp.eq.s32.totalorder %v24, %v28
    %v31 = vlaneseq
    %v32 = vshrl.u32 %v31, 7
    %v33 = vsub.s32 1, %v32
    %v34 = vrot.slane %v21, %v33
    %vm35 = vcmp.eq.s32.totalorder %v23, %v34
    %vm36 = vcmp.eq.s32.totalorder %v24, %v34
    %vm37 = vmor %vm29, %vm35
    %vm38 = vmor %vm30, %vm36
    %v39 = vlaneseq
    %v40 = vshrl.u32 %v39, 7
    %v41 = vsub.s32 2, %v40
    %v42 = vrot.slane %v21, %v41
    %vm43 = vcmp.eq.s32.totalorder %v23, %v42
    %vm44 = vcmp.eq.s32.totalorder %v24, %v42
    %vm45 = vmor %vm37, %vm43
    %vm46 = vmor %vm38, %vm44
    %v47 = vsel %vm45, 1, 0
    %v48 = vsel %vm46, 1, 0
    %v49 = vcvt.s32.f32 %v47
    %v50 = vcvt.s32.f32 %v48
    %51 = vst [vmem:[#allocation5] sm:$0xff] %v49
    %52 = vst [vmem:[#allocation5 + $0x8] sm:$0x3] %v50
    // Predicated region
    $region10: #{tpu_custom_call.1} parent=1 // pred_check
      _
    $region11: #{tpu_custom_call.1} parent=1 // pred_check_branch
      %54 = sbr.rel (0) target = $region13
    $region12: #{tpu_custom_call.1} parent=1 // pred_region
      %s56 = ssub.s32 256, 256
      %57 = vsyncadd [#allocation4], %s56
      %s58 = sshll.u32 [#allocation5], 4
      %s59 = int_to_ptr.vmem [resolvable:$true] %s58
      %64 = dma.vmem_to_hbm [thread:$0]  %s59, 256, %s1, [#allocation4], 128, 128, 8
    $region13: #{tpu_custom_call.1} parent=1 // pred_fallthru
      _
    // Predicated region
    $region14: #{tpu_custom_call.1} parent=1 // pred_check
      _
    $region15: #{tpu_custom_call.1} parent=1 // pred_check_branch
      %66 = sbr.rel (0) target = $region17
    $region16: #{tpu_custom_call.1} parent=1 // pred_region
      %67 = dma.done [#allocation4], 256
    $region17: #{tpu_custom_call.1} parent=1 // pred_fallthru
      _
    %68 = vsyncpa [#allocation3], 1
    %69 = vsyncpa [#allocation4], 1

</llo_original>
